<compile_context>
chip_gen: v6e
topology: v6e:2x2x1
jax: 0.10.0
libtpu: 0.0.40
codegen_flags: <defaults>
</compile_context>

<pallas_src>
import functools

import jax
import jax.numpy as jnp
from jax.experimental import pallas as pl
from jax.experimental.pallas import tpu as pltpu

# Default LIFRefracParameters (norse defaults), compile-time constants.
DT = 0.001
TAU_SYN_INV = 200.0
TAU_MEM_INV = 100.0
V_LEAK = 0.0
V_TH = 1.0
V_RESET = 0.0
RHO_RESET = 5.0

_LANE = 128
_SUBLANE = 8


def _round_up(n, m):
    return (n + m - 1) // m * m


# --------------------------------------------------------------------------
# Capability probes / VMEM planning
# --------------------------------------------------------------------------
def _probe_copy_kernel(x_ref, o_ref):
    o_ref[...] = x_ref[...]


@functools.lru_cache(maxsize=1)
def _single_buffer_weights_ok():
    """True iff pipeline_mode=pl.Buffered(1) compiles+runs on this backend."""
    try:
        spec = pl.BlockSpec((8, 128), lambda i: (0, 0), pipeline_mode=pl.Buffered(1))
        out = pl.pallas_call(
            _probe_copy_kernel,
            out_shape=jax.ShapeDtypeStruct((8, 128), jnp.float32),
            grid=(1,),
            in_specs=[spec],
            out_specs=pl.BlockSpec((8, 128), lambda i: (0, 0)),
        )(jnp.zeros((8, 128), jnp.float32))
        jax.block_until_ready(out)
        return True
    except Exception:  # any rejection -> fall back to default double buffering
        return False


def _weight_spec(shape, index_map):
    """Constant-index weight BlockSpec, single-buffered when supported."""
    if _single_buffer_weights_ok():
        return pl.BlockSpec(shape, index_map, pipeline_mode=pl.Buffered(1))
    return pl.BlockSpec(shape, index_map)


@functools.lru_cache(maxsize=1)
def _usable_vmem_bytes():
    """~82% of physical VMEM (105 MiB on v5e/v6e, 52 MiB on v7x), capped at 100 MiB."""
    try:
        phys = int(pltpu.get_tpu_info().vmem_capacity_bytes)
    except Exception:
        phys = 64 << 20  # conservative fallback: v7x per-core VMEM
    return int(min(phys * 0.82, 100 << 20))


def _plan_tiles(batch_p, per_row_bytes, weight_bytes):
    """Pick the largest multiple-of-8 batch tile that fits VMEM; return (tile_b, vmem_limit)."""
    budget = _usable_vmem_bytes()
    headroom = 8 << 20  # Mosaic internal scratch / spill slack
    w_resident = weight_bytes if _single_buffer_weights_ok() else 2 * weight_bytes
    avail = budget - w_resident - headroom
    if avail < per_row_bytes * _SUBLANE:
        # TODO(synk): Hp-column-tiled variant for hidden sizes whose resident
        # weights do not fit VMEM (second grid axis over hidden columns).
        raise ValueError(
            "LIFRefrac resident weights (%d bytes) leave no room for batch tiles "
            "within the %d-byte VMEM budget" % (w_resident, budget))
    tile_b = min(batch_p, 1024,
                 max(_SUBLANE, (avail // per_row_bytes) // _SUBLANE * _SUBLANE))
    if batch_p >= 2 * _SUBLANE and tile_b >= batch_p:
        # Keep >= 2 grid steps so both v7x TensorCores get work (harmless on 1-TC chips).
        tile_b = _round_up(batch_p // 2, _SUBLANE)
    needed = w_resident + tile_b * per_row_bytes + headroom
    vmem_limit = int(min(budget, max(needed, 32 << 20)))
    return int(tile_b), vmem_limit


# --------------------------------------------------------------------------
# Shared per-step math (norse lif_refrac_step equations)
# --------------------------------------------------------------------------
def _lif_refrac_update(x, z, v, i, rho, wi_t, wr_t):
    dtype = v.dtype
    # LIF Euler step
    dv = DT * TAU_MEM_INV * ((V_LEAK - v) + i)
    v_decayed = v + dv
    i_decayed = i - DT * TAU_SYN_INV * i
    # Input + recurrent current jumps on the MXU (single f32 accumulator).
    w_dtype = wi_t.dtype
    acc = jnp.dot(x.astype(w_dtype), wi_t, preferred_element_type=jnp.float32)
    acc = acc + jnp.dot(z.astype(w_dtype), wr_t, preferred_element_type=jnp.float32)
    i_new = i_decayed + acc.astype(dtype)
    # Spike / reset / refractory (bool masks + where blends).
    spiked = v_decayed - V_TH > 0.0          # heaviside: strictly > 0 (norse)
    refrac = rho > 0.0
    v_after = jnp.where(spiked, V_RESET, v_decayed)
    v_new = jnp.where(refrac, v, v_after)    # hold v while refractory
    z_fire = jnp.logical_and(spiked, jnp.logical_not(refrac))
    z_new = z_fire.astype(dtype)
    rho_held = jnp.maximum(rho - refrac.astype(dtype), 0.0)
    rho_new = jnp.where(z_fire, RHO_RESET, rho_held)
    return z_new, v_new, i_new, rho_new


# --------------------------------------------------------------------------
# Kernels
# --------------------------------------------------------------------------
def _lif_refrac_step_kernel(x_ref, wi_t_ref, wr_t_ref, s_ref, s_out_ref):
    z_new, v_new, i_new, rho_new = _lif_refrac_update(
        x_ref[...], s_ref[0], s_ref[1], s_ref[2], s_ref[3],
        wi_t_ref[...], wr_t_ref[...])
    s_out_ref[0] = z_new
    s_out_ref[1] = v_new
    s_out_ref[2] = i_new
    s_out_ref[3] = rho_new


def _lif_refrac_seq_kernel(x_ref, wi_t_ref, wr_t_ref, s0_ref, z_out_ref, s_out_ref):
    t = pl.program_id(1)

    @pl.when(t == 0)
    def _():
        # Load the initial state into the VMEM-resident output block (it stays
        # resident across the whole T axis for this batch tile).
        s_out_ref[...] = s0_ref[...]

    z_new, v_new, i_new, rho_new = _lif_refrac_update(
        x_ref[0], s_out_ref[0], s_out_ref[1], s_out_ref[2], s_out_ref[3],
        wi_t_ref[...], wr_t_ref[...])
    s_out_ref[0] = z_new
    s_out_ref[1] = v_new
    s_out_ref[2] = i_new
    s_out_ref[3] = rho_new
    z_out_ref[0] = z_new


# --------------------------------------------------------------------------
# Host-side helpers / wrappers
# --------------------------------------------------------------------------
def prepare_lif_refrac_weights(w_in, w_rec, weight_dtype=jnp.float32):
    """Transpose + zero-pad the weights ONCE (do NOT call per step).

    w_in:  [hidden, input_size] (PyTorch Linear layout), w_rec: [hidden, hidden]
    Returns (wi_t [Kp, Hp], wr_t [Hp, Hp]) with Kp, Hp rounded up to 128.
    NOTE: weight_dtype=bf16 halves weight DMA but can flip hard-threshold spikes
    vs the f32/torch reference; default stays f32.
    """
    hidden, in_features = w_in.shape
    hp = _round_up(hidden, _LANE)
    kp = _round_up(in_features, _LANE)
    wi_t = jnp.zeros((kp, hp), weight_dtype)
    wi_t = wi_t.at[:in_features, :hidden].set(jnp.asarray(w_in, weight_dtype).T)
    wr_t = jnp.zeros((hp, hp), weight_dtype)
    wr_t = wr_t.at[:hidden, :hidden].set(jnp.asarray(w_rec, weight_dtype).T)
    return wi_t, wr_t


def lif_refrac_initial_state(batch, hidden_padded, dtype=jnp.float32):
    """Packed default state (4, Bp, Hp); planes are (z=0, v=v_leak, i=0, rho=0)."""
    bp = _round_up(max(int(batch), _SUBLANE), _SUBLANE)
    state = jnp.zeros((4, bp, hidden_padded), dtype)
    if V_LEAK != 0.0:
        state = state.at[1].set(V_LEAK)
    return state


def lif_refrac_spikes(state, batch, hidden_size):
    """Slice the output spikes out of a packed state (do this ONCE, outside loops)."""
    return state[0, :batch, :hidden_size]


def _pad_x(x, bp, kp, dtype, batch_axis, feat_axis):
    pads = [(0, 0)] * x.ndim
    pads[batch_axis] = (0, bp - x.shape[batch_axis])
    pads[feat_axis] = (0, kp - x.shape[feat_axis])
    x = x.astype(dtype)
    if any(p != (0, 0) for p in pads):
        x = jnp.pad(x, pads)
    return x


def lif_refrac_step(x, wi_t, wr_t, state):
    """One LIFRefracCell forward step (module-style, per-step interface).

    x:     [B, input_size]
    wi_t:  [Kp, Hp], wr_t: [Hp, Hp]  (from prepare_lif_refrac_weights)
    state: packed (4, Bp, Hp) from lif_refrac_initial_state / a previous step.
    Returns the new packed state; spikes are new_state[0] (padded — slice once
    at the end with lif_refrac_spikes).  `state` is donated (aliased in place);
    do not reuse it after this call.
    """
    kp, hp = wi_t.shape
    _, bp, _ = state.shape
    dtype = state.dtype
    itemsize = jnp.dtype(dtype).itemsize
    x = _pad_x(x, bp, kp, dtype, batch_axis=0, feat_axis=1)

    w_bytes = (wi_t.size * jnp.dtype(wi_t.dtype).itemsize
               + wr_t.size * jnp.dtype(wr_t.dtype).itemsize)
    # Per-row VMEM: double-buffered x tile + double-buffered packed state in & out tiles.
    per_row = 2 * kp * itemsize + 2 * 2 * 4 * hp * itemsize
    tile_b, vmem_limit = _plan_tiles(bp, per_row, w_bytes)
    grid = (pl.cdiv(bp, tile_b),)

    state_spec = pl.BlockSpec((4, tile_b, hp), lambda bt: (0, bt, 0))
    new_state = pl.pallas_call(
        _lif_refrac_step_kernel,
        out_shape=jax.ShapeDtypeStruct((4, bp, hp), dtype),
        grid=grid,
        in_specs=[
            pl.BlockSpec((tile_b, kp), lambda bt: (bt, 0)),
            _weight_spec((kp, hp), lambda bt: (0, 0)),
            _weight_spec((hp, hp), lambda bt: (0, 0)),
            state_spec,
        ],
        out_specs=state_spec,
        input_output_aliases={3: 0},  # in-place recurrent state update
        compiler_params=pltpu.CompilerParams(
            dimension_semantics=("parallel",),
            vmem_limit_bytes=vmem_limit),
        cost_estimate=pl.CostEstimate(
            flops=int(2 * bp * (kp + hp) * hp),
            transcendentals=0,
            bytes_accessed=int(w_bytes + bp * kp * itemsize + 8 * bp * hp * itemsize)),
    )(x, wi_t, wr_t, state)
    return new_state


def lif_refrac_sequence(xs, wi_t, wr_t, state):
    """T fused LIFRefracCell steps in one kernel; state lives in VMEM across T.

    xs:    [T, B, input_size]
    state: packed (4, Bp, Hp) initial state (donated; do not reuse).
    Returns (zs [T, Bp, Hp], final packed state (4, Bp, Hp)).
    """
    kp, hp = wi_t.shape
    _, bp, _ = state.shape
    dtype = state.dtype
    itemsize = jnp.dtype(dtype).itemsize
    t_steps = xs.shape[0]
    xs = _pad_x(xs, bp, kp, dtype, batch_axis=1, feat_axis=2)

    w_bytes = (wi_t.size * jnp.dtype(wi_t.dtype).itemsize
               + wr_t.size * jnp.dtype(wr_t.dtype).itemsize)
    # Per-row VMEM: x tile + z-out tile (double-buffered) + packed state in/out blocks.
    per_row = 2 * kp * itemsize + 2 * hp * itemsize + 2 * 2 * 4 * hp * itemsize
    tile_b, vmem_limit = _plan_tiles(bp, per_row, w_bytes)
    grid = (pl.cdiv(bp, tile_b), t_steps)

    state_spec = pl.BlockSpec((4, tile_b, hp), lambda bt, t: (0, bt, 0))
    zs, final_state = pl.pallas_call(
        _lif_refrac_seq_kernel,
        out_shape=(jax.ShapeDtypeStruct((t_steps, bp, hp), dtype),
                   jax.ShapeDtypeStruct((4, bp, hp), dtype)),
        grid=grid,
        in_specs=[
            pl.BlockSpec((1, tile_b, kp), lambda bt, t: (t, bt, 0)),
            _weight_spec((kp, hp), lambda bt, t: (0, 0)),
            _weight_spec((hp, hp), lambda bt, t: (0, 0)),
            state_spec,
        ],
        out_specs=(pl.BlockSpec((1, tile_b, hp), lambda bt, t: (t, bt, 0)),
                   state_spec),
        input_output_aliases={3: 1},  # initial-state buffer reused for the final state
        compiler_params=pltpu.CompilerParams(
            dimension_semantics=("parallel", "arbitrary"),
            vmem_limit_bytes=vmem_limit),
        cost_estimate=pl.CostEstimate(
            flops=int(2 * t_steps * bp * (kp + hp) * hp),
            transcendentals=0,
            bytes_accessed=int(w_bytes + t_steps * bp * (kp + hp) * itemsize
                               + 8 * bp * hp * itemsize)),
    )(xs, wi_t, wr_t, state)
    return zs, final_state


# --------------------------------------------------------------------------
# Pure-jnp reference (unpadded) + demo
# --------------------------------------------------------------------------
def _lif_refrac_step_ref(x, w_in, w_rec, state):
    z, v, i, rho = state
    dv = DT * TAU_MEM_INV * ((V_LEAK - v) + i)
    v_decayed = v + dv
    i_decayed = i - DT * TAU_SYN_INV * i
    z_new = (v_decayed - V_TH > 0.0).astype(v.dtype)
    v_new = (1.0 - z_new) * v_decayed + z_new * V_RESET
    i_new = i_decayed + x @ w_in.T + z @ w_rec.T
    mask = (rho > 0.0).astype(v.dtype)
    v_new = (1.0 - mask) * v_new + mask * v
    z_new = (1.0 - mask) * z_new
    rho_new = (1.0 - z_new) * jnp.maximum(rho - mask, 0.0) + z_new * RHO_RESET
    return z_new, (z_new, v_new, i_new, rho_new)


if __name__ == "__main__":
    batch, input_size, hidden_size, timesteps = 16, 16, 32, 6

    key = jax.random.PRNGKey(0)
    k_xs, k_wi, k_wr = jax.random.split(key, 3)
    w_in = jax.random.normal(k_wi, (hidden_size, input_size), jnp.float32) / jnp.sqrt(
        jnp.float32(input_size))
    w_rec = jax.random.normal(k_wr, (hidden_size, hidden_size), jnp.float32) / jnp.sqrt(
        jnp.float32(hidden_size))
    xs = jax.random.normal(k_xs, (timesteps, batch, input_size), jnp.float32)
    xs = xs * 8.0  # drive some neurons over threshold so spike/refractory paths run

    wi_t, wr_t = prepare_lif_refrac_weights(w_in, w_rec)
    hp = wi_t.shape[1]

    # ---- pure-jnp reference over the whole sequence -------------------------
    ref_state = (jnp.zeros((batch, hidden_size), jnp.float32),
                 jnp.full((batch, hidden_size), V_LEAK, jnp.float32),
                 jnp.zeros((batch, hidden_size), jnp.float32),
                 jnp.zeros((batch, hidden_size), jnp.float32))
    zs_ref = []
    for t in range(timesteps):
        z_t, ref_state = _lif_refrac_step_ref(xs[t], w_in, w_rec, ref_state)
        zs_ref.append(z_t)
    zs_ref = jnp.stack(zs_ref)

    def close(a, b):
        return bool(jnp.allclose(a, b, atol=1e-4, rtol=1e-4))

    # ---- per-step kernel (module-style interface) ----------------------------
    step = jax.jit(lif_refrac_step)
    s = lif_refrac_initial_state(batch, hp)
    for t in range(timesteps):
        s = step(xs[t], wi_t, wr_t, s)
    jax.block_until_ready(s)
    ok = close(lif_refrac_spikes(s, batch, hidden_size), zs_ref[-1])
    for plane, ref in zip(s[:, :batch, :hidden_size], ref_state):
        ok &= close(plane, ref)
    if not ok:
        raise AssertionError("per-step Pallas LIFRefrac mismatch vs jnp reference")

    # ---- fused T-step kernel (state carried in VMEM) -------------------------
    seq = jax.jit(lif_refrac_sequence)
    zs, s_final = seq(xs, wi_t, wr_t, lif_refrac_initial_state(batch, hp))
    jax.block_until_ready((zs, s_final))
    ok = close(zs[:, :batch, :hidden_size], zs_ref)
    for plane, ref in zip(s_final[:, :batch, :hidden_size], ref_state):
        ok &= close(plane, ref)
    if not ok:
        raise AssertionError("fused-sequence Pallas LIFRefrac mismatch vs jnp reference")

    print("KERNEL_OK")
</pallas_src>

<mosaic_0001>
module attributes {stable_mosaic.version = 11 : i64} {
  func.func @_lif_refrac_step_kernel(%arg0: i32, %arg1: memref<8x128xf32, #tpu.memory_space<vmem>>, %arg2: memref<128x128xf32, #tpu.memory_space<vmem>>, %arg3: memref<128x128xf32, #tpu.memory_space<vmem>>, %arg4: memref<4x8x128xf32, #tpu.memory_space<vmem>>, %arg5: memref<4x8x128xf32, #tpu.memory_space<vmem>>) attributes {dimension_semantics = [#tpu.dimension_semantics<parallel>], iteration_bounds = array<i64: 2>, scalar_prefetch = 0 : i64, scratch_operands = 0 : i64, tpu.core_type = #tpu.core_type<tc>, window_params = [{transform_indices = @transform_0, window_bounds = array<i64: 8, 128>}, {pipeline_mode = #tpu.pipeline_mode<synchronous>, transform_indices = @transform_1, window_bounds = array<i64: 128, 128>}, {pipeline_mode = #tpu.pipeline_mode<synchronous>, transform_indices = @transform_2, window_bounds = array<i64: 128, 128>}, {transform_indices = @transform_3, window_bounds = array<i64: 4, 8, 128>}, {transform_indices = @transform_4, window_bounds = array<i64: 4, 8, 128>}]} {
    %c0 = arith.constant 0 : index
    %c0_0 = arith.constant 0 : index
    %0 = vector.load %arg1[%c0, %c0_0] : memref<8x128xf32, #tpu.memory_space<vmem>>, vector<8x128xf32>
    %c0_1 = arith.constant 0 : index
    %c0_2 = arith.constant 0 : index
    %c0_3 = arith.constant 0 : index
    %1 = vector.load %arg4[%c0_1, %c0_2, %c0_3] : memref<4x8x128xf32, #tpu.memory_space<vmem>>, vector<1x8x128xf32>
    %2 = vector.shape_cast %1 : vector<1x8x128xf32> to vector<8x128xf32>
    %c1 = arith.constant 1 : index
    %c0_4 = arith.constant 0 : index
    %c0_5 = arith.constant 0 : index
    %3 = vector.load %arg4[%c1, %c0_4, %c0_5] : memref<4x8x128xf32, #tpu.memory_space<vmem>>, vector<1x8x128xf32>
    %4 = vector.shape_cast %3 : vector<1x8x128xf32> to vector<8x128xf32>
    %c2 = arith.constant 2 : index
    %c0_6 = arith.constant 0 : index
    %c0_7 = arith.constant 0 : index
    %5 = vector.load %arg4[%c2, %c0_6, %c0_7] : memref<4x8x128xf32, #tpu.memory_space<vmem>>, vector<1x8x128xf32>
    %6 = vector.shape_cast %5 : vector<1x8x128xf32> to vector<8x128xf32>
    %c3 = arith.constant 3 : index
    %c0_8 = arith.constant 0 : index
    %c0_9 = arith.constant 0 : index
    %7 = vector.load %arg4[%c3, %c0_8, %c0_9] : memref<4x8x128xf32, #tpu.memory_space<vmem>>, vector<1x8x128xf32>
    %8 = vector.shape_cast %7 : vector<1x8x128xf32> to vector<8x128xf32>
    %c0_10 = arith.constant 0 : index
    %c0_11 = arith.constant 0 : index
    %9 = vector.load %arg2[%c0_10, %c0_11] : memref<128x128xf32, #tpu.memory_space<vmem>>, vector<128x128xf32>
    %c0_12 = arith.constant 0 : index
    %c0_13 = arith.constant 0 : index
    %10 = vector.load %arg3[%c0_12, %c0_13] : memref<128x128xf32, #tpu.memory_space<vmem>>, vector<128x128xf32>
    %cst = arith.constant 0.000000e+00 : f32
    %11 = vector.broadcast %cst : f32 to vector<8x128xf32>
    %12 = arith.subf %11, %4 : vector<8x128xf32>
    %13 = arith.addf %12, %6 : vector<8x128xf32>
    %cst_14 = arith.constant 1.000000e-01 : f32
    %14 = vector.broadcast %cst_14 : f32 to vector<8x128xf32>
    %15 = arith.mulf %14, %13 : vector<8x128xf32>
    %16 = arith.addf %4, %15 : vector<8x128xf32>
    %cst_15 = arith.constant 2.000000e-01 : f32
    %17 = vector.broadcast %cst_15 : f32 to vector<8x128xf32>
    %18 = arith.mulf %17, %6 : vector<8x128xf32>
    %19 = arith.subf %6, %18 : vector<8x128xf32>
    %cst_16 = arith.constant dense<0.000000e+00> : vector<8x128xf32>
    %20 = tpu.matmul %0, %9, %cst_16 {dimension_numbers = #tpu.dot_dimension_numbers<[1], [0], [0], [1], [0, 0, 1, 1], [], []>} : vector<8x128xf32>, vector<128x128xf32>, vector<8x128xf32> -> vector<8x128xf32>
    %cst_17 = arith.constant dense<0.000000e+00> : vector<8x128xf32>
    %21 = tpu.matmul %2, %10, %cst_17 {dimension_numbers = #tpu.dot_dimension_numbers<[1], [0], [0], [1], [0, 0, 1, 1], [], []>} : vector<8x128xf32>, vector<128x128xf32>, vector<8x128xf32> -> vector<8x128xf32>
    %22 = arith.addf %20, %21 : vector<8x128xf32>
    %23 = arith.addf %19, %22 : vector<8x128xf32>
    %cst_18 = arith.constant 1.000000e+00 : f32
    %24 = vector.broadcast %cst_18 : f32 to vector<8x128xf32>
    %25 = arith.subf %16, %24 : vector<8x128xf32>
    %cst_19 = arith.constant 0.000000e+00 : f32
    %26 = vector.broadcast %cst_19 : f32 to vector<8x128xf32>
    %27 = arith.cmpf ogt, %25, %26 : vector<8x128xf32>
    %cst_20 = arith.constant 0.000000e+00 : f32
    %28 = vector.broadcast %cst_20 : f32 to vector<8x128xf32>
    %29 = arith.cmpf ogt, %8, %28 : vector<8x128xf32>
    %cst_21 = arith.constant 0.000000e+00 : f32
    %30 = vector.broadcast %cst_21 : f32 to vector<8x128xf32>
    %31 = arith.select %27, %30, %16 : vector<8x128xi1>, vector<8x128xf32>
    %32 = arith.select %29, %4, %31 : vector<8x128xi1>, vector<8x128xf32>
    %cst_22 = arith.constant dense<true> : vector<8x128xi1>
    %33 = arith.xori %29, %cst_22 : vector<8x128xi1>
    %34 = arith.andi %27, %33 : vector<8x128xi1>
    %35 = arith.extui %34 : vector<8x128xi1> to vector<8x128xi32>
    %36 = arith.sitofp %35 : vector<8x128xi32> to vector<8x128xf32>
    %37 = arith.extui %29 : vector<8x128xi1> to vector<8x128xi32>
    %38 = arith.sitofp %37 : vector<8x128xi32> to vector<8x128xf32>
    %39 = arith.subf %8, %38 : vector<8x128xf32>
    %cst_23 = arith.constant 0.000000e+00 : f32
    %40 = vector.broadcast %cst_23 : f32 to vector<8x128xf32>
    %41 = arith.maximumf %39, %40 : vector<8x128xf32>
    %cst_24 = arith.constant 5.000000e+00 : f32
    %42 = vector.broadcast %cst_24 : f32 to vector<8x128xf32>
    %43 = arith.select %34, %42, %41 : vector<8x128xi1>, vector<8x128xf32>
    %c0_25 = arith.constant 0 : index
    %c0_26 = arith.constant 0 : index
    %c0_27 = arith.constant 0 : index
    %44 = vector.load %arg5[%c0_25, %c0_26, %c0_27] : memref<4x8x128xf32, #tpu.memory_space<vmem>>, vector<1x8x128xf32>
    %45 = vector.shape_cast %44 : vector<1x8x128xf32> to vector<8x128xf32>
    %46 = vector.shape_cast %36 : vector<8x128xf32> to vector<1x8x128xf32>
    tpu.vector_store %arg5[%c0_25, %c0_26, %c0_27], %46 {strides = array<i32>} : memref<4x8x128xf32, #tpu.memory_space<vmem>>, vector<1x8x128xf32>,
    %c1_28 = arith.constant 1 : index
    %c0_29 = arith.constant 0 : index
    %c0_30 = arith.constant 0 : index
    %47 = vector.load %arg5[%c1_28, %c0_29, %c0_30] : memref<4x8x128xf32, #tpu.memory_space<vmem>>, vector<1x8x128xf32>
    %48 = vector.shape_cast %47 : vector<1x8x128xf32> to vector<8x128xf32>
    %49 = vector.shape_cast %32 : vector<8x128xf32> to vector<1x8x128xf32>
    tpu.vector_store %arg5[%c1_28, %c0_29, %c0_30], %49 {strides = array<i32>} : memref<4x8x128xf32, #tpu.memory_space<vmem>>, vector<1x8x128xf32>,
    %c2_31 = arith.constant 2 : index
    %c0_32 = arith.constant 0 : index
    %c0_33 = arith.constant 0 : index
    %50 = vector.load %arg5[%c2_31, %c0_32, %c0_33] : memref<4x8x128xf32, #tpu.memory_space<vmem>>, vector<1x8x128xf32>
    %51 = vector.shape_cast %50 : vector<1x8x128xf32> to vector<8x128xf32>
    %52 = vector.shape_cast %23 : vector<8x128xf32> to vector<1x8x128xf32>
    tpu.vector_store %arg5[%c2_31, %c0_32, %c0_33], %52 {strides = array<i32>} : memref<4x8x128xf32, #tpu.memory_space<vmem>>, vector<1x8x128xf32>,
    %c3_34 = arith.constant 3 : index
    %c0_35 = arith.constant 0 : index
    %c0_36 = arith.constant 0 : index
    %53 = vector.load %arg5[%c3_34, %c0_35, %c0_36] : memref<4x8x128xf32, #tpu.memory_space<vmem>>, vector<1x8x128xf32>
    %54 = vector.shape_cast %53 : vector<1x8x128xf32> to vector<8x128xf32>
    %55 = vector.shape_cast %43 : vector<8x128xf32> to vector<1x8x128xf32>
    tpu.vector_store %arg5[%c3_34, %c0_35, %c0_36], %55 {strides = array<i32>} : memref<4x8x128xf32, #tpu.memory_space<vmem>>, vector<1x8x128xf32>,
    return
  }
  func.func @transform_0(%arg0: i32) -> (i32, i32) {
    %c0_i32 = arith.constant 0 : i32
    %c0_i32_0 = arith.constant 0 : i32
    return %arg0, %c0_i32 : i32, i32
  }
  func.func @transform_1(%arg0: i32) -> (i32, i32) {
    %c0_i32 = arith.constant 0 : i32
    %c0_i32_0 = arith.constant 0 : i32
    %c0_i32_1 = arith.constant 0 : i32
    return %c0_i32, %c0_i32_0 : i32, i32
  }
  func.func @transform_2(%arg0: i32) -> (i32, i32) {
    %c0_i32 = arith.constant 0 : i32
    %c0_i32_0 = arith.constant 0 : i32
    %c0_i32_1 = arith.constant 0 : i32
    return %c0_i32, %c0_i32_0 : i32, i32
  }
  func.func @transform_3(%arg0: i32) -> (i32, i32, i32) {
    %c0_i32 = arith.constant 0 : i32
    %c0_i32_0 = arith.constant 0 : i32
    %c0_i32_1 = arith.constant 0 : i32
    return %c0_i32, %arg0, %c0_i32_0 : i32, i32, i32
  }
  func.func @transform_4(%arg0: i32) -> (i32, i32, i32) {
    %c0_i32 = arith.constant 0 : i32
    %c0_i32_0 = arith.constant 0 : i32
    %c0_i32_1 = arith.constant 0 : i32
    return %c0_i32, %arg0, %c0_i32_0 : i32, i32, i32
  }
}

</mosaic_0001>

<llo_original>
// kernel: lif_refrac_step.1
$region0: #{lif_refrac_step.1}
  #allocation0 [shape = 'u32[]', space=smem, size = 0x4, offset = 0x4, fixed_abs, tag = 'smem constant byte address 0x4 - core index']
  #allocation1 [shape = 'u32[144,128]{1,0:T(1,128)}', space=vmem, size = 0x12000, scoped, tag = 'internal scratch']
  %s0 = inlined_call_operand.vmem [shape: f32[16,128], index: 0, kind: input, shape index: {}]
  %s1 = inlined_call_operand.vmem [shape: f32[128,128], index: 1, kind: input, shape index: {}]
  %s2 = inlined_call_operand.hbm [shape: f32[128,128], index: 2, kind: input, shape index: {}]
  %s3 = inlined_call_operand.hbm [shape: f32[4,16,128], index: 3, kind: input, shape index: {}, may-alias: {3,4}]
  %s4 = inlined_call_operand.hbm [shape: f32[4,16,128], index: 4, kind: output, shape index: {}, may-alias: {3,4}]
  %s5 = sld [smem:[#allocation0]]
  $region57: #{lif_refrac_step.1} parent=0
    _
  %s7 = ssub.s32 1, %s5
  %s8 = scalar_select 0, %s7, %s5
  $region1: #{lif_refrac_step.1} parent=0
    #allocation2 [shape = 'u8[65536]{0}', space=vmem, size = 0x10000, scoped, tag = 'input window, operand 2, single buffered']
    #allocation3 [shape = 's32[2]{0}', space=sflag, size = 0x8, scoped, tag = 'scoped memory for lif_refrac_step.1']
    #allocation4 [shape = 's32[2]{0}', space=sflag, size = 0x8, scoped, tag = 'scoped memory for lif_refrac_step.1']
    #allocation5 [shape = 'u8[32768]{0}', space=vmem, size = 0x8000, scoped, tag = 'input window, operand 3']
    #allocation6 [shape = 's32[2]{0}', space=sflag, size = 0x8, scoped, tag = 'scoped memory for lif_refrac_step.1']
    #allocation7 [shape = 'u8[32768]{0}', space=vmem, size = 0x8000, scoped, tag = 'output window, operand 0']
    %9 = vsyncpa [#allocation3], 0
    %10 = vsyncpa [#allocation6], 0
    %s11 = scalar_lea.sflag [#allocation6], 1
    %12 = vsyncpa %s11, 0
    %13 = vsyncpa [#allocation4], 0
    %s14 = scalar_lea.sflag [#allocation4], 1
    %15 = vsyncpa %s14, 0
    loop: start=0, step=1, limit=4
    $region2: #{lif_refrac_step.1} parent=1 // loop_pre_header
      _
    $region3: #{lif_refrac_step.1} parent=1 // loop_header
      %s17 = sphi 0, %s21
      %p18 = scmp.ge.s32.totalorder %s17, 4
      %s27 = sphi 0, %s29
      %s30 = sphi 0, %s27
      %s31 = sphi 0, %s30
      %s47 = sphi 0, %s31
      %s51 = sphi 0, %s51
      %s53 = sphi 0, %s51
      %s54 = sphi 0, %s53
      %s68 = sphi 0, %s54
      %s72 = sphi 0, %s72
      %s74 = sphi 0, %s72
      %s75 = sphi 0, %s74
      %s89 = sphi 0, %s75
      %s95 = sphi 0, %s97
      %s98 = sphi 0, %s95
      %s99 = sphi 0, %s98
      %s115 = sphi 0, %s99
      %s121 = sphi 0, %s123
      %s124 = sphi 0, %s121
      %s125 = sphi 0, %s124
      %s141 = sphi 0, %s125
    $region4: #{lif_refrac_step.1} parent=1 // loop_header_branch
      %20 = sbr.rel (%p18) target = $region8
    $region5: #{lif_refrac_step.1} parent=1 // loop_body
      %s22 = ssub.s32 %s17, 1
      %s23 = ssub.s32 %s17, 2
      %s24 = sadd.s32 %s17, 1
      %s25 = ssub.s32 %s17, %s24
      %p26 = scmp.eq.s32.totalorder %s25, 0
      %s28 = sadd.s32 %s27, 1
      %s29 = scalar_select %p26, %s27, %s28
      %p32 = pneg %p26
      %p33 = scmp.eq.s32.totalorder %s17, 1
      %p34 = por %p32, %p33
      %p35 = scmp.ne.s32.totalorder %s27, %s30
      %p36 = scmp.eq.s32.totalorder %s17, 0
      %p37 = por %p35, %p36
      %p38 = scmp.ne.s32.totalorder %s27, %s30
      %p39 = scmp.eq.s32.totalorder %s22, 1
      %p40 = por %p38, %p39
      %p41 = scmp.ne.s32.totalorder %s30, %s31
      %p42 = scmp.eq.s32.totalorder %s22, 0
      %p43 = por %p41, %p42
      %p44 = scmp.ne.s32.totalorder %s30, %s31
      %p45 = scmp.eq.s32.totalorder %s23, 1
      %p46 = por %p44, %p45
      %p48 = scmp.ne.s32.totalorder %s31, %s47
      %p49 = scmp.eq.s32.totalorder %s23, 0
      %p50 = por %p48, %p49
      %s52 = sadd.s32 %s51, 1
      %p55 = scmp.eq.s32.totalorder %s17, 1
      %p56 = scmp.ne.s32.totalorder %s51, %s53
      %p57 = scmp.eq.s32.totalorder %s17, 0
      %p58 = por %p56, %p57
      %p59 = scmp.ne.s32.totalorder %s51, %s53
      %p60 = scmp.eq.s32.totalorder %s22, 1
      %p61 = por %p59, %p60
      %p62 = scmp.ne.s32.totalorder %s53, %s54
      %p63 = scmp.eq.s32.totalorder %s22, 0
      %p64 = por %p62, %p63
      %p65 = scmp.ne.s32.totalorder %s53, %s54
      %p66 = scmp.eq.s32.totalorder %s23, 1
      %p67 = por %p65, %p66
      %p69 = scmp.ne.s32.totalorder %s54, %s68
      %p70 = scmp.eq.s32.totalorder %s23, 0
      %p71 = por %p69, %p70
      %s73 = sadd.s32 %s72, 1
      %p76 = scmp.eq.s32.totalorder %s17, 1
      %p77 = scmp.ne.s32.totalorder %s72, %s74
      %p78 = scmp.eq.s32.totalorder %s17, 0
      %p79 = por %p77, %p78
      %p80 = scmp.ne.s32.totalorder %s72, %s74
      %p81 = scmp.eq.s32.totalorder %s22, 1
      %p82 = por %p80, %p81
      %p83 = scmp.ne.s32.totalorder %s74, %s75
      %p84 = scmp.eq.s32.totalorder %s22, 0
      %p85 = por %p83, %p84
      %p86 = scmp.ne.s32.totalorder %s74, %s75
      %p87 = scmp.eq.s32.totalorder %s23, 1
      %p88 = por %p86, %p87
      %p90 = scmp.ne.s32.totalorder %s75, %s89
      %p91 = scmp.eq.s32.totalorder %s23, 0
      %p92 = por %p90, %p91
      %s93 = ssub.s32 %s17, %s24
      %p94 = scmp.eq.s32.totalorder %s93, 0
      %s96 = sadd.s32 %s95, 1
      %s97 = scalar_select %p94, %s95, %s96
      %p100 = pneg %p94
      %p101 = scmp.eq.s32.totalorder %s17, 1
      %p102 = por %p100, %p101
      %p103 = scmp.ne.s32.totalorder %s95, %s98
      %p104 = scmp.eq.s32.totalorder %s17, 0
      %p105 = por %p103, %p104
      %p106 = scmp.ne.s32.totalorder %s95, %s98
      %p107 = scmp.eq.s32.totalorder %s22, 1
      %p108 = por %p106, %p107
      %p109 = scmp.ne.s32.totalorder %s98, %s99
      %p110 = scmp.eq.s32.totalorder %s22, 0
      %p111 = por %p109, %p110
      %p112 = scmp.ne.s32.totalorder %s98, %s99
      %p113 = scmp.eq.s32.totalorder %s23, 1
      %p114 = por %p112, %p113
      %p116 = scmp.ne.s32.totalorder %s99, %s115
      %p117 = scmp.eq.s32.totalorder %s23, 0
      %p118 = por %p116, %p117
      %s119 = ssub.s32 %s17, %s24
      %p120 = scmp.eq.s32.totalorder %s119, 0
      %s122 = sadd.s32 %s121, 1
      %s123 = scalar_select %p120, %s121, %s122
      %p126 = pneg %p120
      %p127 = scmp.eq.s32.totalorder %s17, 1
      %p128 = por %p126, %p127
      %p129 = scmp.ne.s32.totalorder %s121, %s124
      %p130 = scmp.eq.s32.totalorder %s17, 0
      %p131 = por %p129, %p130
      %p132 = scmp.ne.s32.totalorder %s121, %s124
      %p133 = scmp.eq.s32.totalorder %s22, 1
      %p134 = por %p132, %p133
      %p135 = scmp.ne.s32.totalorder %s124, %s125
      %p136 = scmp.eq.s32.totalorder %s22, 0
      %p137 = por %p135, %p136
      %p138 = scmp.ne.s32.totalorder %s124, %s125
      %p139 = scmp.eq.s32.totalorder %s23, 1
      %p140 = por %p138, %p139
      %p142 = scmp.ne.s32.totalorder %s125, %s141
      %p143 = scmp.eq.s32.totalorder %s23, 0
      %p144 = por %p142, %p143
      %p145 = scmp.le.s32.totalorder 1, %s17
      %p146 = scmp.lt.s32.totalorder %s17, 3
      %p147 = pnand %p145, %p146
      %p148 = pneg %p147
      // Predicated region
      $region9: #{lif_refrac_step.1} parent=5 // pred_check
        _
      $region10: #{lif_refrac_step.1} parent=5 // pred_check_branch
        %150 = sbr.rel (%p147) target = $region12
      $region11: #{lif_refrac_step.1} parent=5 // pred_region
        %s151 = ssub.s32 %s17, 1
        // Predicated region
        $region13: #{lif_refrac_step.1} parent=11 // pred_check
          %p152 = pneg %p64
        $region14: #{lif_refrac_step.1} parent=11 // pred_check_branch
          %154 = sbr.rel (%p152) target = $region16
        $region15: #{lif_refrac_step.1} parent=11 // pred_region
          _
        $region16: #{lif_refrac_step.1} parent=11 // pred_fallthru
          _
        // Predicated region
        $region17: #{lif_refrac_step.1} parent=11 // pred_check
          %p155 = pneg %p85
        $region18: #{lif_refrac_step.1} parent=11 // pred_check_branch
          %157 = sbr.rel (%p155) target = $region20
        $region19: #{lif_refrac_step.1} parent=11 // pred_region
          %s159 = ssub.s32 2048, 2048
          %160 = vsyncadd [#allocation3], %s159
          %s161 = sshll.u32 [#allocation2], 4
          %s162 = int_to_ptr.vmem [resolvable:$true] %s161
          %167 = dma.hbm_to_vmem [thread:$0]  %s2, 2048, %s162, [#allocation3], 128, 128, 8
        $region20: #{lif_refrac_step.1} parent=11 // pred_fallthru
          _
      $region12: #{lif_refrac_step.1} parent=5 // pred_fallthru
        _
      %p168 = scmp.lt.s32.totalorder %s17, 2
      // Predicated region
      $region21: #{lif_refrac_step.1} parent=5 // pred_check
        %p169 = pneg %p168
      $region22: #{lif_refrac_step.1} parent=5 // pred_check_branch
        %171 = sbr.rel (%p169) target = $region24
      $region23: #{lif_refrac_step.1} parent=5 // pred_region
        // Predicated region
        $region25: #{lif_refrac_step.1} parent=23 // pred_check
          %p172 = pneg %p37
        $region26: #{lif_refrac_step.1} parent=23 // pred_check_branch
          %174 = sbr.rel (%p172) target = $region28
        $region27: #{lif_refrac_step.1} parent=23 // pred_region
          %p175 = scmp.lt.s32.totalorder %s17, 1
          %s176 = scalar_select %p175, %s17, 1
          %s177 = smul.addr %s176, 8
          %s178 = scalar_lea.vmem %s0, %s177
        $region28: #{lif_refrac_step.1} parent=23 // pred_fallthru
          _
        // Predicated region
        $region29: #{lif_refrac_step.1} parent=23 // pred_check
          %p179 = pneg %p105
        $region30: #{lif_refrac_step.1} parent=23 // pred_check_branch
          %181 = sbr.rel (%p179) target = $region32
        $region31: #{lif_refrac_step.1} parent=23 // pred_region
          %s182 = sand.u32 %s95, 1
          %s183 = scalar_lea.sflag [#allocation6], %s182
          %s184 = sand.u32 %s95, 1
          %s185 = smul.addr %s184, 32
          %s186 = scalar_lea.vmem [#allocation5], %s185
          %s188 = ssub.s32 512, 512
          %189 = vsyncadd %s183, %s188
          %s190 = smul.addr %s17, 128
          %s191 = scalar_lea.hbm %s3, %s190
          %s192 = sshll.u32 %s186, 4
          %s193 = int_to_ptr.vmem [resolvable:$true] %s192
          %198 = dma.hbm_to_vmem [thread:$0]  %s191, 512, %s193, %s183, 256, 128, 8
        $region32: #{lif_refrac_step.1} parent=23 // pred_fallthru
          _
      $region24: #{lif_refrac_step.1} parent=5 // pred_fallthru
        _
      %p199 = scmp.le.s32.totalorder 1, %s17
      %p200 = scmp.lt.s32.totalorder %s17, 3
      %p201 = pnand %p199, %p200
      %p202 = pneg %p201
      // Predicated region
      $region33: #{lif_refrac_step.1} parent=5 // pred_check
        _
      $region34: #{lif_refrac_step.1} parent=5 // pred_check_branch
        %204 = sbr.rel (%p201) target = $region36
      $region35: #{lif_refrac_step.1} parent=5 // pred_region
        %s205 = ssub.s32 %s17, 1
        // Predicated region
        $region37: #{lif_refrac_step.1} parent=35 // pred_check
          %p206 = pneg %p85
        $region38: #{lif_refrac_step.1} parent=35 // pred_check_branch
          %208 = sbr.rel (%p206) target = $region40
        $region39: #{lif_refrac_step.1} parent=35 // pred_region
          %209 = dma.done [#allocation3], 2048
        $region40: #{lif_refrac_step.1} parent=35 // pred_fallthru
          _
        %s210 = sand.u32 %s98, 1
        %s211 = scalar_lea.sflag [#allocation6], %s210
        %s212 = sand.u32 %s98, 1
        %s213 = smul.addr %s212, 32
        %s214 = scalar_lea.vmem [#allocation5], %s213
        // Predicated region
        $region41: #{lif_refrac_step.1} parent=35 // pred_check
          %p215 = pneg %p111
        $region42: #{lif_refrac_step.1} parent=35 // pred_check_branch
          %217 = sbr.rel (%p215) target = $region44
        $region43: #{lif_refrac_step.1} parent=35 // pred_region
          %218 = dma.done %s211, 512
        $region44: #{lif_refrac_step.1} parent=35 // pred_fallthru
          _
        %p219 = scmp.lt.s32.totalorder %s22, 1
        %s220 = scalar_select %p219, %s22, 1
        %s221 = smul.addr %s220, 8
        %s222 = scalar_lea.vmem %s0, %s221
        %p223 = pneg %p43
        %p224 = pneg %p40
        %p225 = pneg %p64
        %p226 = pneg %p61
        %p227 = pneg %p85
        %p228 = pneg %p82
        %s229 = sand.u32 %s98, 1
        %s230 = scalar_lea.sflag [#allocation6], %s229
        %s231 = sand.u32 %s98, 1
        %s232 = smul.addr %s231, 32
        %s233 = scalar_lea.vmem [#allocation5], %s232
        %p234 = pneg %p111
        %p235 = pneg %p108
        %p236 = pneg %p137
        %p237 = pneg %p134
        %s238 = sand.u32 %s124, 1
        %s239 = scalar_lea.sflag [#allocation4], %s238
        %s240 = sand.u32 %s124, 1
        %s241 = smul.addr %s240, 32
        %s242 = scalar_lea.vmem [#allocation7], %s241
        %p243 = scmp.lt.s32.totalorder %s22, 1
        %s244 = scalar_select %p243, %s22, 1
        %s245 = smul.addr %s244, 8
        %s246 = scalar_lea.vmem %s0, %s245
        %v247 = vld [vmem:[%s246] sm:$0xff]
        %v248 = vld [vmem:[%s214] sm:$0xff]
        %s249 = scalar_lea.vmem %s214, 8 [#allocation5]
        %v250 = vld [vmem:[%s249] sm:$0xff]
        %s251 = scalar_lea.vmem %s214, 16 [#allocation5]
        %v252 = vld [vmem:[%s251] sm:$0xff]
        %s253 = scalar_lea.vmem %s214, 24 [#allocation5]
        %v254 = vld [vmem:[%s253] sm:$0xff]
        %v255 = vld [vmem:[%s1] sm:$0xff]
        %v256 = vld [vmem:[%s1 + $0x8] sm:$0xff]
        %v257 = vld [vmem:[%s1 + $0x10] sm:$0xff]
        %v258 = vld [vmem:[%s1 + $0x18] sm:$0xff]
        %v259 = vld [vmem:[%s1 + $0x20] sm:$0xff]
        %v260 = vld [vmem:[%s1 + $0x28] sm:$0xff]
        %v261 = vld [vmem:[%s1 + $0x30] sm:$0xff]
        %v262 = vld [vmem:[%s1 + $0x38] sm:$0xff]
        %v263 = vld [vmem:[%s1 + $0x40] sm:$0xff]
        %v264 = vld [vmem:[%s1 + $0x48] sm:$0xff]
        %v265 = vld [vmem:[%s1 + $0x50] sm:$0xff]
        %v266 = vld [vmem:[%s1 + $0x58] sm:$0xff]
        %v267 = vld [vmem:[%s1 + $0x60] sm:$0xff]
        %v268 = vld [vmem:[%s1 + $0x68] sm:$0xff]
        %v269 = vld [vmem:[%s1 + $0x70] sm:$0xff]
        %v270 = vld [vmem:[%s1 + $0x78] sm:$0xff]
        %v271 = vld [vmem:[#allocation2] sm:$0xff]
        %v272 = vld [vmem:[#allocation2 + $0x8] sm:$0xff]
        %v273 = vld [vmem:[#allocation2 + $0x10] sm:$0xff]
        %v274 = vld [vmem:[#allocation2 + $0x18] sm:$0xff]
        %v275 = vld [vmem:[#allocation2 + $0x20] sm:$0xff]
        %v276 = vld [vmem:[#allocation2 + $0x28] sm:$0xff]
        %v277 = vld [vmem:[#allocation2 + $0x30] sm:$0xff]
        %v278 = vld [vmem:[#allocation2 + $0x38] sm:$0xff]
        %v279 = vld [vmem:[#allocation2 + $0x40] sm:$0xff]
        %v280 = vld [vmem:[#allocation2 + $0x48] sm:$0xff]
        %v281 = vld [vmem:[#allocation2 + $0x50] sm:$0xff]
        %v282 = vld [vmem:[#allocation2 + $0x58] sm:$0xff]
        %v283 = vld [vmem:[#allocation2 + $0x60] sm:$0xff]
        %v284 = vld [vmem:[#allocation2 + $0x68] sm:$0xff]
        %v285 = vld [vmem:[#allocation2 + $0x70] sm:$0xff]
        %v286 = vld [vmem:[#allocation2 + $0x78] sm:$0xff]
        %v287 = vsub.f32 0.0, %v250
        %v288 = vadd.f32 %v287, %v252
        %v289 = vmul.f32 %v288, 0.1
        %v290 = vadd.f32 %v250, %v289
        %v291 = vmul.f32 %v252, 0.2
        %v292 = vsub.f32 %v252, %v291
        %293 = vmatprep.subr.mxu0 0.0
        %294 = vmatpush1.msra.mxu0 %v286
        %295 = vmatprep.subr.mxu0 0.0
        %296 = vmatpush1.msra.mxu0 %v285
        %297 = vmatprep.subr.mxu0 0.0
        %298 = vmatpush1.msra.mxu0 %v284
        %299 = vmatprep.subr.mxu0 0.0
        %300 = vmatpush1.msra.mxu0 %v283
        %301 = vmatprep.subr.mxu0 0.0
        %302 = vmatpush1.msra.mxu0 %v282
        %303 = vmatprep.subr.mxu0 0.0
        %304 = vmatpush1.msra.mxu0 %v281
        %305 = vmatprep.subr.mxu0 0.0
        %306 = vmatpush1.msra.mxu0 %v280
        %307 = vmatprep.subr.mxu0 0.0
        %308 = vmatpush1.msra.mxu0 %v279
        %309 = vmatprep.subr.mxu0 0.0
        %310 = vmatpush1.msra.mxu0 %v278
        %311 = vmatprep.subr.mxu0 0.0
        %312 = vmatpush1.msra.mxu0 %v277
        %313 = vmatprep.subr.mxu0 0.0
        %314 = vmatpush1.msra.mxu0 %v276
        %315 = vmatprep.subr.mxu0 0.0
        %316 = vmatpush1.msra.mxu0 %v275
        %317 = vmatprep.subr.mxu0 0.0
        %318 = vmatpush1.msra.mxu0 %v274
        %319 = vmatprep.subr.mxu0 0.0
        %320 = vmatpush1.msra.mxu0 %v273
        %321 = vmatprep.subr.mxu0 0.0
        %322 = vmatpush1.msra.mxu0 %v272
        %323 = vmatprep.subr.mxu0 0.0
        %324 = vmatpush1.msra.mxu0 %v271
        %325 = vmatprep.subr.mxu0 0.0
        %326 = vmatpush2.msra.mxu0 0.0
        %327 = vmatprep.subr.mxu0 0.0
        %328 = vmatpush2.msra.mxu0 0.0
        %329 = vmatprep.subr.mxu0 0.0
        %330 = vmatpush2.msra.mxu0 0.0
        %331 = vmatprep.subr.mxu0 0.0
        %332 = vmatpush2.msra.mxu0 0.0
        %333 = vmatprep.subr.mxu0 0.0
        %334 = vmatpush2.msra.mxu0 0.0
        %335 = vmatprep.subr.mxu0 0.0
        %336 = vmatpush2.msra.mxu0 0.0
        %337 = vmatprep.subr.mxu0 0.0
        %338 = vmatpush2.msra.mxu0 0.0
        %339 = vmatprep.subr.mxu0 0.0
        %340 = vmatpush2.msra.mxu0 0.0
        %341 = vmatprep.subr.mxu0 0.0
        %342 = vmatpush2.msra.mxu0 0.0
        %343 = vmatprep.subr.mxu0 0.0
        %344 = vmatpush2.msra.mxu0 0.0
        %345 = vmatprep.subr.mxu0 0.0
        %346 = vmatpush2.msra.mxu0 0.0
        %347 = vmatprep.subr.mxu0 0.0
        %348 = vmatpush2.msra.mxu0 0.0
        %349 = vmatprep.subr.mxu0 0.0
        %350 = vmatpush2.msra.mxu0 0.0
        %351 = vmatprep.subr.mxu0 0.0
        %352 = vmatpush2.msra.mxu0 0.0
        %353 = vmatprep.subr.mxu0 0.0
        %354 = vmatpush2.msra.mxu0 0.0
        %355 = vmatprep.subr.mxu0 0.0
        %356 = vmatpush2.msra.mxu0 0.0
        %357 = vmatprep.mubr.f32.mxu0 0.0
        %358 = vmatmul.mubr.f32.gmra.mxu0 %v248
        %v359 = vpop.f32.mrf.mxu0
        %v360 = vadd.f32 0.0, %v359
        %v361 = vpop.f32.mrf.mxu0
        %362 = vdwg.mxu0
        %363 = vmatprep.subr.mxu0 0.0
        %364 = vmatpush1.msra.mxu0 %v270
        %365 = vmatprep.subr.mxu0 0.0
        %366 = vmatpush1.msra.mxu0 %v269
        %367 = vmatprep.subr.mxu0 0.0
        %368 = vmatpush1.msra.mxu0 %v268
        %369 = vmatprep.subr.mxu0 0.0
        %370 = vmatpush1.msra.mxu0 %v267
        %371 = vmatprep.subr.mxu0 0.0
        %372 = vmatpush1.msra.mxu0 %v266
        %373 = vmatprep.subr.mxu0 0.0
        %374 = vmatpush1.msra.mxu0 %v265
        %375 = vmatprep.subr.mxu0 0.0
        %376 = vmatpush1.msra.mxu0 %v264
        %377 = vmatprep.subr.mxu0 0.0
        %378 = vmatpush1.msra.mxu0 %v263
        %379 = vmatprep.subr.mxu0 0.0
        %380 = vmatpush1.msra.mxu0 %v262
        %381 = vmatprep.subr.mxu0 0.0
        %382 = vmatpush1.msra.mxu0 %v261
        %383 = vmatprep.subr.mxu0 0.0
        %384 = vmatpush1.msra.mxu0 %v260
        %385 = vmatprep.subr.mxu0 0.0
        %386 = vmatpush1.msra.mxu0 %v259
        %387 = vmatprep.subr.mxu0 0.0
        %388 = vmatpush1.msra.mxu0 %v258
        %389 = vmatprep.subr.mxu0 0.0
        %390 = vmatpush1.msra.mxu0 %v257
        %391 = vmatprep.subr.mxu0 0.0
        %392 = vmatpush1.msra.mxu0 %v256
        %393 = vmatprep.subr.mxu0 0.0
        %394 = vmatpush1.msra.mxu0 %v255
        %395 = vmatprep.subr.mxu0 0.0
        %396 = vmatpush2.msra.mxu0 0.0
        %397 = vmatprep.subr.mxu0 0.0
        %398 = vmatpush2.msra.mxu0 0.0
        %399 = vmatprep.subr.mxu0 0.0
        %400 = vmatpush2.msra.mxu0 0.0
        %401 = vmatprep.subr.mxu0 0.0
        %402 = vmatpush2.msra.mxu0 0.0
        %403 = vmatprep.subr.mxu0 0.0
        %404 = vmatpush2.msra.mxu0 0.0
        %405 = vmatprep.subr.mxu0 0.0
        %406 = vmatpush2.msra.mxu0 0.0
        %407 = vmatprep.subr.mxu0 0.0
        %408 = vmatpush2.msra.mxu0 0.0
        %409 = vmatprep.subr.mxu0 0.0
        %410 = vmatpush2.msra.mxu0 0.0
        %411 = vmatprep.subr.mxu0 0.0
        %412 = vmatpush2.msra.mxu0 0.0
        %413 = vmatprep.subr.mxu0 0.0
        %414 = vmatpush2.msra.mxu0 0.0
        %415 = vmatprep.subr.mxu0 0.0
        %416 = vmatpush2.msra.mxu0 0.0
        %417 = vmatprep.subr.mxu0 0.0
        %418 = vmatpush2.msra.mxu0 0.0
        %419 = vmatprep.subr.mxu0 0.0
        %420 = vmatpush2.msra.mxu0 0.0
        %421 = vmatprep.subr.mxu0 0.0
        %422 = vmatpush2.msra.mxu0 0.0
        %423 = vmatprep.subr.mxu0 0.0
        %424 = vmatpush2.msra.mxu0 0.0
        %425 = vmatprep.subr.mxu0 0.0
        %426 = vmatpush2.msra.mxu0 0.0
        %427 = vmatprep.mubr.f32.mxu0 0.0
        %428 = vmatmul.mubr.f32.gmra.mxu0 %v247
        %v429 = vpop.f32.mrf.mxu0
        %v430 = vadd.f32 %v360, %v429
        %v431 = vpop.f32.mrf.mxu0
        %432 = vdwg.mxu0
        %v433 = vadd.f32 %v292, %v430
        %v434 = vsub.f32 %v290, 1.0
        %vm435 = vcmp.gt.f32.partialorder %v434, 0.0
        %vm436 = vcmp.gt.f32.partialorder %v254, 0.0
        %v437 = vsel %vm435, 0.0, %v290
        %v438 = vsel %vm436, %v250, %v437
        %vm439 = vmxor %vm436, 1
        %vm440 = vmand %vm435, %vm439
        %v441 = vsel %vm440, 1, 0
        %v442 = vcvt.s32.f32 %v441
        %v443 = vsel %vm436, 1, 0
        %v444 = vcvt.s32.f32 %v443
        %v445 = vsub.f32 %v254, %v444
        %v446 = vmax.f32 %v445, 0.0
        %v447 = vsel %vm440, 5.0, %v446
        %448 = vst [vmem:[%s242] sm:$0xff] %v442
        %s449 = scalar_lea.vmem %s242, 8 [#allocation7]
        %450 = vst [vmem:[%s449] sm:$0xff] %v438
        %s451 = scalar_lea.vmem %s242, 16 [#allocation7]
        %452 = vst [vmem:[%s451] sm:$0xff] %v433
        %s453 = scalar_lea.vmem %s242, 24 [#allocation7]
        %454 = vst [vmem:[%s453] sm:$0xff] %v447
        %s455 = sand.u32 %s124, 1
        %s456 = scalar_lea.sflag [#allocation4], %s455
        %s457 = sand.u32 %s124, 1
        %s458 = smul.addr %s457, 32
        %s459 = scalar_lea.vmem [#allocation7], %s458
        // Predicated region
        $region45: #{lif_refrac_step.1} parent=35 // pred_check
          %p460 = pneg %p134
        $region46: #{lif_refrac_step.1} parent=35 // pred_check_branch
          %462 = sbr.rel (%p460) target = $region48
        $region47: #{lif_refrac_step.1} parent=35 // pred_region
          %s464 = ssub.s32 512, 512
          %465 = vsyncadd %s456, %s464
          %s466 = smul.addr %s22, 128
          %s467 = scalar_lea.hbm %s4, %s466
          %s468 = sshll.u32 %s459, 4
          %s469 = int_to_ptr.vmem [resolvable:$true] %s468
          %474 = dma.vmem_to_hbm [thread:$0]  %s469, 512, %s467, %s456, 128, 256, 8
        $region48: #{lif_refrac_step.1} parent=35 // pred_fallthru
          _
      $region36: #{lif_refrac_step.1} parent=5 // pred_fallthru
        _
      %p475 = scmp.le.s32.totalorder 2, %s17
      // Predicated region
      $region49: #{lif_refrac_step.1} parent=5 // pred_check
        %p476 = pneg %p475
      $region50: #{lif_refrac_step.1} parent=5 // pred_check_branch
        %478 = sbr.rel (%p476) target = $region52
      $region51: #{lif_refrac_step.1} parent=5 // pred_region
        %s479 = ssub.s32 %s17, 2
        // Predicated region
        $region53: #{lif_refrac_step.1} parent=51 // pred_check
          %p480 = pneg %p140
        $region54: #{lif_refrac_step.1} parent=51 // pred_check_branch
          %482 = sbr.rel (%p480) target = $region56
        $region55: #{lif_refrac_step.1} parent=51 // pred_region
          %s483 = sand.u32 %s125, 1
          %s484 = scalar_lea.sflag [#allocation4], %s483
          %s485 = sand.u32 %s125, 1
          %s486 = smul.addr %s485, 32
          %s487 = scalar_lea.vmem [#allocation7], %s486
          %488 = dma.done %s484, 512
        $region56: #{lif_refrac_step.1} parent=51 // pred_fallthru
          _
      $region52: #{lif_refrac_step.1} parent=5 // pred_fallthru
        _
    $region6: #{lif_refrac_step.1} parent=1 // loop_footer
      %s21 = sadd.s32 1, %s17
    $region7: #{lif_refrac_step.1} parent=1 // loop_footer_branch
      %16 = sbr.rel target = $region3
    $region8: #{lif_refrac_step.1} parent=1 // loop_exit
      _
    %489 = vsyncpa [#allocation3], 1
    %s490 = scalar_lea.sflag [#allocation3], 1
    %491 = vsyncpa %s490, 1
    %492 = vsyncpa [#allocation6], 1
    %s493 = scalar_lea.sflag [#allocation6], 1
    %494 = vsyncpa %s493, 1
    %495 = vsyncpa [#allocation4], 1
    %s496 = scalar_lea.sflag [#allocation4], 1
    %497 = vsyncpa %s496, 1

</llo_original>
